<compile_context>
chip_gen: v5e
topology: v5e:2x2
jax: 0.10.0
libtpu: 0.0.40
codegen_flags: <defaults>
</compile_context>

<pallas_src>
import functools
import math

import jax
import jax.numpy as jnp
from jax.experimental import pallas as pl
from jax.experimental.pallas import tpu as pltpu


def _round_up(a, b):
    return ((a + b - 1) // b) * b


def _label_smoothing_kernel(x_ref, tgt_ref, td_ref, part_ref, *,
                            size, padding_idx, smooth_val, confidence, row_const):
    x = x_ref[...].astype(jnp.float32)          # (TN, Vp) log-probs
    tgt = tgt_ref[...]                          # (TN, 1)  int32 targets

    col = jax.lax.broadcasted_iota(jnp.int32, x.shape, 1)

    # true_dist: smoothing/(size-2) everywhere, confidence at the target column,
    # zero at the padding column (and lane-padding columns col >= size), zero
    # rows whose target == padding_idx (includes row-padding rows).
    td = jnp.where(col == tgt, jnp.float32(confidence), jnp.float32(smooth_val))
    col_ok = jnp.logical_and(col != padding_idx, col < size)
    row_ok = tgt != padding_idx                                  # (TN, 1)
    td = jnp.where(jnp.logical_and(col_ok, row_ok), td, jnp.float32(0.0))
    td_ref[...] = td.astype(td_ref.dtype)

    # KLDivLoss(reduction='sum') = sum( xlogy(td, td) - td * x ).
    # xlogy(td, td) summed over one non-padding row is the compile-time
    # constant `row_const`; padding rows contribute 0 -> no transcendentals.
    n_rows = jnp.sum(row_ok.astype(jnp.float32))
    partial = n_rows * jnp.float32(row_const) - jnp.sum(td * x)

    # Lane-dense (1, 1, 128) per-block partial; wrapper reads lane 0 and sums.
    part_ref[...] = jnp.broadcast_to(partial.reshape(1, 1, 1), part_ref.shape)


def label_smoothing_loss(x, target, *, size, padding_idx, smoothing, tile_n=None):
    """Returns (scalar loss, true_dist) matching LabelSmoothing.forward."""
    N, V = x.shape
    assert V == size
    assert size > 2, "smoothing / (size - 2) requires size > 2"

    confidence = 1.0 - smoothing
    smooth_val = smoothing / (size - 2)
    # Closed-form xlogy(td, td) for one non-padding row (xlogy(0, 0) := 0).
    row_const = 0.0
    if confidence > 0.0:
        row_const += confidence * math.log(confidence)
    if smooth_val > 0.0:
        row_const += (size - 2) * smooth_val * math.log(smooth_val)

    itemsize = jnp.dtype(x.dtype).itemsize
    Vp = _round_up(V, 128)                       # lane-dense last dim

    if tile_n is None:
        # Double-buffered x-in + true_dist-out ~= 4 * tile_n * Vp * itemsize.
        # Keep it around 16 MiB so it fits v7x's 64 MiB VMEM with headroom.
        budget = 16 * 1024 * 1024
        cand = budget // (4 * Vp * itemsize)
        tile_n = max(8, min(1024, (cand // 8) * 8))
    tile_n = min(tile_n, _round_up(N, 8))
    tile_n = max(8, (tile_n // 8) * 8)

    Np = _round_up(N, tile_n)
    grid_n = Np // tile_n

    # Pad inputs (padded rows get target == padding_idx -> zero contribution).
    if (Np, Vp) != (N, V):
        x_p = jnp.zeros((Np, Vp), x.dtype).at[:N, :V].set(x)
    else:
        x_p = x
    tgt_p = jnp.full((Np, 1), padding_idx, dtype=jnp.int32)
    tgt_p = tgt_p.at[:N, 0].set(target.astype(jnp.int32))

    kernel = functools.partial(
        _label_smoothing_kernel,
        size=size, padding_idx=padding_idx,
        smooth_val=smooth_val, confidence=confidence, row_const=row_const)

    td_p, partials = pl.pallas_call(
        kernel,
        out_shape=(jax.ShapeDtypeStruct((Np, Vp), x.dtype),          # true_dist
                   jax.ShapeDtypeStruct((grid_n, 1, 128), jnp.float32)),  # per-block loss
        grid=(grid_n,),
        in_specs=[
            pl.BlockSpec((tile_n, Vp), lambda i: (i, 0)),   # x tile
            pl.BlockSpec((tile_n, 1), lambda i: (i, 0)),    # target tile
        ],
        out_specs=[
            pl.BlockSpec((tile_n, Vp), lambda i: (i, 0)),   # true_dist tile
            pl.BlockSpec((1, 1, 128), lambda i: (i, 0, 0)),  # per-block partial
        ],
        compiler_params=pltpu.CompilerParams(
            dimension_semantics=("parallel",),              # no carried state -> megacore-friendly
            vmem_limit_bytes=48 * 1024 * 1024),
    )(x_p, tgt_p)

    loss = jnp.sum(partials[:, 0, 0])
    true_dist = td_p[:N, :V]
    return loss, true_dist


def _reference(x, target, *, size, padding_idx, smoothing):
    conf = 1.0 - smoothing
    N, V = x.shape
    td = jnp.full((N, V), smoothing / (size - 2), dtype=jnp.float32)
    td = td.at[jnp.arange(N), target].set(conf)
    td = td.at[:, padding_idx].set(0.0)
    td = jnp.where((target == padding_idx)[:, None], 0.0, td)
    safe_td = jnp.where(td > 0.0, td, 1.0)
    loss = jnp.sum(jnp.where(td > 0.0, td * jnp.log(safe_td), 0.0)
                   - td * x.astype(jnp.float32))
    return loss, td


def _run_case(key, n, size, padding_idx, smoothing):
    kx, kt, kp = jax.random.split(key, 3)
    logits = jax.random.normal(kx, (n, size), dtype=jnp.float32)
    x = jax.nn.log_softmax(logits, axis=-1)          # KLDivLoss expects log-probs
    target = jax.random.randint(kt, (n,), 0, size, dtype=jnp.int32)
    # Force a few padding tokens.
    pad_rows = jax.random.randint(kp, (3,), 0, n, dtype=jnp.int32)
    target = target.at[pad_rows].set(padding_idx)

    loss, true_dist = label_smoothing_loss(
        x, target, size=size, padding_idx=padding_idx, smoothing=smoothing)
    loss = jax.block_until_ready(loss)
    true_dist = jax.block_until_ready(true_dist)

    ref_loss, ref_td = _reference(
        x, target, size=size, padding_idx=padding_idx, smoothing=smoothing)

    assert jnp.allclose(true_dist, ref_td, atol=1e-6), "true_dist mismatch"
    assert jnp.allclose(loss, ref_loss, rtol=1e-4, atol=1e-4), (loss, ref_loss)


if __name__ == "__main__":
    PADDING_IDX = 0
    SMOOTHING = 0.1

    key = jax.random.PRNGKey(0)
    k1, k2 = jax.random.split(key)

    # Lane-dense, tile-aligned shapes.
    _run_case(k1, n=64, size=128, padding_idx=PADDING_IDX, smoothing=SMOOTHING)
    # Ragged shapes (exercises wrapper-side row/lane padding paths).
    _run_case(k2, n=50, size=96, padding_idx=PADDING_IDX, smoothing=SMOOTHING)

    print("KERNEL_OK")
</pallas_src>

<mosaic_0001>
module attributes {stable_mosaic.version = 11 : i64} {
  func.func @_label_smoothing_kernel(%arg0: i32, %arg1: memref<64x128xf32, #tpu.memory_space<vmem>>, %arg2: memref<64x1xi32, #tpu.memory_space<vmem>>, %arg3: memref<64x128xf32, #tpu.memory_space<vmem>>, %arg4: memref<1x1x128xf32, #tpu.memory_space<vmem>>) attributes {dimension_semantics = [#tpu.dimension_semantics<parallel>], iteration_bounds = array<i64: 1>, scalar_prefetch = 0 : i64, scratch_operands = 0 : i64, tpu.core_type = #tpu.core_type<tc>, window_params = [{transform_indices = @transform_0, window_bounds = array<i64: 64, 128>}, {transform_indices = @transform_1, window_bounds = array<i64: 64, 1>}, {transform_indices = @transform_2, window_bounds = array<i64: 64, 128>}, {transform_indices = @transform_3, window_bounds = array<i64: 1, 1, 128>}]} {
    %c0 = arith.constant 0 : index
    %c0_0 = arith.constant 0 : index
    %0 = vector.load %arg1[%c0, %c0_0] : memref<64x128xf32, #tpu.memory_space<vmem>>, vector<64x128xf32>
    %c0_1 = arith.constant 0 : index
    %c0_2 = arith.constant 0 : index
    %1 = vector.load %arg2[%c0_1, %c0_2] : memref<64x1xi32, #tpu.memory_space<vmem>>, vector<64x1xi32>
    %2 = tpu.iota {dimensions = array<i32: 1>} : vector<64x128xi32>
    %3 = vector.broadcast %1 : vector<64x1xi32> to vector<64x128xi32>
    %4 = arith.cmpi eq, %2, %3 : vector<64x128xi32>
    %cst = arith.constant 0.899999976 : f32
    %cst_3 = arith.constant 7.93650805E-4 : f32
    %5 = vector.broadcast %cst : f32 to vector<64x128xf32>
    %6 = vector.broadcast %cst_3 : f32 to vector<64x128xf32>
    %7 = arith.select %4, %5, %6 : vector<64x128xi1>, vector<64x128xf32>
    %c0_i32 = arith.constant 0 : i32
    %8 = vector.broadcast %c0_i32 : i32 to vector<64x128xi32>
    %9 = arith.cmpi ne, %2, %8 : vector<64x128xi32>
    %c128_i32 = arith.constant 128 : i32
    %10 = vector.broadcast %c128_i32 : i32 to vector<64x128xi32>
    %11 = arith.cmpi slt, %2, %10 : vector<64x128xi32>
    %12 = arith.andi %9, %11 : vector<64x128xi1>
    %c0_i32_4 = arith.constant 0 : i32
    %13 = vector.broadcast %c0_i32_4 : i32 to vector<64x1xi32>
    %14 = arith.cmpi ne, %1, %13 : vector<64x1xi32>
    %15 = vector.broadcast %14 : vector<64x1xi1> to vector<64x128xi1>
    %16 = arith.andi %12, %15 : vector<64x128xi1>
    %cst_5 = arith.constant 0.000000e+00 : f32
    %17 = vector.broadcast %cst_5 : f32 to vector<64x128xf32>
    %18 = arith.select %16, %7, %17 : vector<64x128xi1>, vector<64x128xf32>
    %c0_6 = arith.constant 0 : index
    %c0_7 = arith.constant 0 : index
    %19 = vector.load %arg3[%c0_6, %c0_7] : memref<64x128xf32, #tpu.memory_space<vmem>>, vector<64x128xf32>
    tpu.vector_store %arg3[%c0_6, %c0_7], %18 {strides = array<i32>} : memref<64x128xf32, #tpu.memory_space<vmem>>, vector<64x128xf32>,
    %20 = arith.extui %14 : vector<64x1xi1> to vector<64x1xi32>
    %21 = arith.sitofp %20 : vector<64x1xi32> to vector<64x1xf32>
    %22 = vector.shape_cast %21 : vector<64x1xf32> to vector<1x64x1xf32>
    %cst_8 = arith.constant dense<0.000000e+00> : vector<1xf32>
    %23 = vector.multi_reduction <add>, %22, %cst_8 [1, 2] : vector<1x64x1xf32> to vector<1xf32>
    %24 = vector.shape_cast %23 : vector<1xf32> to vector<1x1x1xf32>
    %25 = vector.extract %24[0, 0, 0] : f32 from vector<1x1x1xf32>
    %cst_9 = arith.constant -0.808711171 : f32
    %26 = arith.mulf %25, %cst_9 : f32
    %27 = arith.mulf %18, %0 : vector<64x128xf32>
    %28 = vector.shape_cast %27 : vector<64x128xf32> to vector<1x64x128xf32>
    %cst_10 = arith.constant dense<0.000000e+00> : vector<1xf32>
    %29 = vector.multi_reduction <add>, %28, %cst_10 [1, 2] : vector<1x64x128xf32> to vector<1xf32>
    %30 = vector.shape_cast %29 : vector<1xf32> to vector<1x1x1xf32>
    %31 = vector.extract %30[0, 0, 0] : f32 from vector<1x1x1xf32>
    %32 = arith.subf %26, %31 : f32
    %33 = vector.broadcast %32 : f32 to vector<1x1x1xf32>
    %34 = vector.shape_cast %33 : vector<1x1x1xf32> to vector<1x1x1xf32>
    %35 = vector.broadcast %34 : vector<1x1x1xf32> to vector<1x1x128xf32>
    %c0_11 = arith.constant 0 : index
    %c0_12 = arith.constant 0 : index
    %c0_13 = arith.constant 0 : index
    %36 = vector.load %arg4[%c0_11, %c0_12, %c0_13] : memref<1x1x128xf32, #tpu.memory_space<vmem>>, vector<1x1x128xf32>
    tpu.vector_store %arg4[%c0_11, %c0_12, %c0_13], %35 {strides = array<i32>} : memref<1x1x128xf32, #tpu.memory_space<vmem>>, vector<1x1x128xf32>,
    return
  }
  func.func @transform_0(%arg0: i32) -> (i32, i32) {
    %c0_i32 = arith.constant 0 : i32
    %c0_i32_0 = arith.constant 0 : i32
    return %arg0, %c0_i32 : i32, i32
  }
  func.func @transform_1(%arg0: i32) -> (i32, i32) {
    %c0_i32 = arith.constant 0 : i32
    %c0_i32_0 = arith.constant 0 : i32
    return %arg0, %c0_i32 : i32, i32
  }
  func.func @transform_2(%arg0: i32) -> (i32, i32) {
    %c0_i32 = arith.constant 0 : i32
    %c0_i32_0 = arith.constant 0 : i32
    return %arg0, %c0_i32 : i32, i32
  }
  func.func @transform_3(%arg0: i32) -> (i32, i32, i32) {
    %c0_i32 = arith.constant 0 : i32
    %c0_i32_0 = arith.constant 0 : i32
    %c0_i32_1 = arith.constant 0 : i32
    return %arg0, %c0_i32, %c0_i32_0 : i32, i32, i32
  }
}

</mosaic_0001>

<llo_original>
// kernel: tpu_custom_call.1
$region0: #{tpu_custom_call.1}
  #allocation0 [shape = 'u32[]', space=smem, size = 0x4, offset = 0x4, fixed_abs, tag = 'smem constant byte address 0x4 - core index']
  #allocation1 [shape = 'u32[72,128]{1,0:T(1,128)}', space=vmem, size = 0x9000, scoped, tag = 'internal scratch']
  %s0 = inlined_call_operand.vmem [shape: f32[64,128], index: 0, kind: input, shape index: {}]
  %s1 = inlined_call_operand.vmem [shape: s32[64,1], index: 1, kind: input, shape index: {}]
  %s2 = inlined_call_operand.hbm [shape: f32[64,128], index: 2, kind: output, shape index: {0}]
  %s3 = inlined_call_operand.hbm [shape: f32[1,1,128], index: 3, kind: output, shape index: {1}]
  %4 = xla_tuple %s2, %s3
  %s5 = sld [smem:[#allocation0]]
  $region26: #{tpu_custom_call.1} parent=0
    _
  %s7 = ssub.s32 1, %s5
  %s8 = scalar_select 0, %s7, %s5
  $region1: #{tpu_custom_call.1} parent=0
    #allocation2 [shape = 'u8[32768]{0}', space=vmem, size = 0x8000, scoped, tag = 'output window, operand 0, single buffered']
    #allocation3 [shape = 's32[1]{0}', space=sflag, size = 0x4, scoped, tag = 'scoped memory for tpu_custom_call.1']
    #allocation4 [shape = 'u8[512]{0}', space=vmem, size = 0x400, scoped, tag = 'output window, operand 1, single buffered']
    #allocation5 [shape = 's32[1]{0}', space=sflag, size = 0x4, scoped, tag = 'scoped memory for tpu_custom_call.1']
    %9 = vsyncpa [#allocation3], 0
    %10 = vsyncpa [#allocation5], 0
    // Predicated region
    $region2: #{tpu_custom_call.1} parent=1 // pred_check
      _
    $region3: #{tpu_custom_call.1} parent=1 // pred_check_branch
      %12 = sbr.rel (0) target = $region5
    $region4: #{tpu_custom_call.1} parent=1 // pred_region
      _
    $region5: #{tpu_custom_call.1} parent=1 // pred_fallthru
      _
    // Predicated region
    $region6: #{tpu_custom_call.1} parent=1 // pred_check
      _
    $region7: #{tpu_custom_call.1} parent=1 // pred_check_branch
      %14 = sbr.rel (0) target = $region9
    $region8: #{tpu_custom_call.1} parent=1 // pred_region
      _
    $region9: #{tpu_custom_call.1} parent=1 // pred_fallthru
      _
    %v15 = vld [vmem:[%s0] sm:$0xff]
    %v16 = vld [vmem:[%s0 + $0x8] sm:$0xff]
    %v17 = vld [vmem:[%s0 + $0x10] sm:$0xff]
    %v18 = vld [vmem:[%s0 + $0x18] sm:$0xff]
    %v19 = vld [vmem:[%s0 + $0x20] sm:$0xff]
    %v20 = vld [vmem:[%s0 + $0x28] sm:$0xff]
    %v21 = vld [vmem:[%s0 + $0x30] sm:$0xff]
    %v22 = vld [vmem:[%s0 + $0x38] sm:$0xff]
    %v23 = vld [vmem:[%s1] sm:$0xff]
    %v24 = vld [vmem:[%s1 + $0x8] sm:$0xff]
    %v25 = vld [vmem:[%s1 + $0x10] sm:$0xff]
    %v26 = vld [vmem:[%s1 + $0x18] sm:$0xff]
    %v27 = vld [vmem:[%s1 + $0x20] sm:$0xff]
    %v28 = vld [vmem:[%s1 + $0x28] sm:$0xff]
    %v29 = vld [vmem:[%s1 + $0x30] sm:$0xff]
    %v30 = vld [vmem:[%s1 + $0x38] sm:$0xff]
    %v31 = vlaneseq
    %v32 = vand.u32 %v31, 127
    %33 = vset.pattern.permute.xlu0 0
    %34 = vperm.xlu0 %33, %v23
    %v35 = vpop.permute.xlu0 %34
    %36 = vset.pattern.permute.xlu0 0
    %37 = vperm.xlu0 %36, %v24
    %v38 = vpop.permute.xlu0 %37
    %39 = vset.pattern.permute.xlu0 0
    %40 = vperm.xlu0 %39, %v25
    %v41 = vpop.permute.xlu0 %40
    %42 = vset.pattern.permute.xlu0 0
    %43 = vperm.xlu0 %42, %v26
    %v44 = vpop.permute.xlu0 %43
    %45 = vset.pattern.permute.xlu0 0
    %46 = vperm.xlu0 %45, %v27
    %v47 = vpop.permute.xlu0 %46
    %48 = vset.pattern.permute.xlu0 0
    %49 = vperm.xlu0 %48, %v28
    %v50 = vpop.permute.xlu0 %49
    %51 = vset.pattern.permute.xlu0 0
    %52 = vperm.xlu0 %51, %v29
    %v53 = vpop.permute.xlu0 %52
    %54 = vset.pattern.permute.xlu0 0
    %55 = vperm.xlu0 %54, %v30
    %v56 = vpop.permute.xlu0 %55
    %vm57 = vcmp.eq.s32.totalorder %v32, %v35
    %vm58 = vcmp.eq.s32.totalorder %v32, %v38
    %vm59 = vcmp.eq.s32.totalorder %v32, %v41
    %vm60 = vcmp.eq.s32.totalorder %v32, %v44
    %vm61 = vcmp.eq.s32.totalorder %v32, %v47
    %vm62 = vcmp.eq.s32.totalorder %v32, %v50
    %vm63 = vcmp.eq.s32.totalorder %v32, %v53
    %vm64 = vcmp.eq.s32.totalorder %v32, %v56
    %v65 = vsel %vm57, 0.9, 0.0007936508
    %v66 = vsel %vm58, 0.9, 0.0007936508
    %v67 = vsel %vm59, 0.9, 0.0007936508
    %v68 = vsel %vm60, 0.9, 0.0007936508
    %v69 = vsel %vm61, 0.9, 0.0007936508
    %v70 = vsel %vm62, 0.9, 0.0007936508
    %v71 = vsel %vm63, 0.9, 0.0007936508
    %v72 = vsel %vm64, 0.9, 0.0007936508
    %vm73 = vcmp.ne.s32.totalorder %v32, 0
    %vm74 = vcmp.lt.s32.totalorder %v32, 128
    %vm75 = vmand %vm73, %vm74
    %vm76 = vcmp.ne.s32.totalorder %v23, 0
    %vm77 = vcmp.ne.s32.totalorder %v24, 0
    %vm78 = vcmp.ne.s32.totalorder %v25, 0
    %vm79 = vcmp.ne.s32.totalorder %v26, 0
    %vm80 = vcmp.ne.s32.totalorder %v27, 0
    %vm81 = vcmp.ne.s32.totalorder %v28, 0
    %vm82 = vcmp.ne.s32.totalorder %v29, 0
    %vm83 = vcmp.ne.s32.totalorder %v30, 0
    %v84 = vsel %vm76, 1, 0
    %v85 = vsel %vm77, 1, 0
    %v86 = vsel %vm78, 1, 0
    %v87 = vsel %vm79, 1, 0
    %v88 = vsel %vm80, 1, 0
    %v89 = vsel %vm81, 1, 0
    %v90 = vsel %vm82, 1, 0
    %v91 = vsel %vm83, 1, 0
    %92 = vset.pattern.permute.xlu0 0
    %93 = vperm.xlu0 %92, %v84
    %v94 = vpop.permute.xlu0 %93
    %95 = vset.pattern.permute.xlu0 0
    %96 = vperm.xlu0 %95, %v85
    %v97 = vpop.permute.xlu0 %96
    %98 = vset.pattern.permute.xlu0 0
    %99 = vperm.xlu0 %98, %v86
    %v100 = vpop.permute.xlu0 %99
    %101 = vset.pattern.permute.xlu0 0
    %102 = vperm.xlu0 %101, %v87
    %v103 = vpop.permute.xlu0 %102
    %104 = vset.pattern.permute.xlu0 0
    %105 = vperm.xlu0 %104, %v88
    %v106 = vpop.permute.xlu0 %105
    %107 = vset.pattern.permute.xlu0 0
    %108 = vperm.xlu0 %107, %v89
    %v109 = vpop.permute.xlu0 %108
    %110 = vset.pattern.permute.xlu0 0
    %111 = vperm.xlu0 %110, %v90
    %v112 = vpop.permute.xlu0 %111
    %113 = vset.pattern.permute.xlu0 0
    %114 = vperm.xlu0 %113, %v91
    %v115 = vpop.permute.xlu0 %114
    %vm116 = vcmp.eq.s32.totalorder %v94, 1
    %vm117 = vcmp.eq.s32.totalorder %v97, 1
    %vm118 = vcmp.eq.s32.totalorder %v100, 1
    %vm119 = vcmp.eq.s32.totalorder %v103, 1
    %vm120 = vcmp.eq.s32.totalorder %v106, 1
    %vm121 = vcmp.eq.s32.totalorder %v109, 1
    %vm122 = vcmp.eq.s32.totalorder %v112, 1
    %vm123 = vcmp.eq.s32.totalorder %v115, 1
    %vm124 = vmand %vm75, %vm116
    %vm125 = vmand %vm75, %vm117
    %vm126 = vmand %vm75, %vm118
    %vm127 = vmand %vm75, %vm119
    %vm128 = vmand %vm75, %vm120
    %vm129 = vmand %vm75, %vm121
    %vm130 = vmand %vm75, %vm122
    %vm131 = vmand %vm75, %vm123
    %v132 = vsel %vm124, %v65, 0.0
    %v133 = vsel %vm125, %v66, 0.0
    %v134 = vsel %vm126, %v67, 0.0
    %v135 = vsel %vm127, %v68, 0.0
    %v136 = vsel %vm128, %v69, 0.0
    %v137 = vsel %vm129, %v70, 0.0
    %v138 = vsel %vm130, %v71, 0.0
    %v139 = vsel %vm131, %v72, 0.0
    %140 = vst [vmem:[#allocation2] sm:$0xff] %v132
    %141 = vst [vmem:[#allocation2 + $0x8] sm:$0xff] %v133
    %142 = vst [vmem:[#allocation2 + $0x10] sm:$0xff] %v134
    %143 = vst [vmem:[#allocation2 + $0x18] sm:$0xff] %v135
    %144 = vst [vmem:[#allocation2 + $0x20] sm:$0xff] %v136
    %145 = vst [vmem:[#allocation2 + $0x28] sm:$0xff] %v137
    %146 = vst [vmem:[#allocation2 + $0x30] sm:$0xff] %v138
    %147 = vst [vmem:[#allocation2 + $0x38] sm:$0xff] %v139
    %v148 = vcvt.s32.f32 %v84
    %v149 = vcvt.s32.f32 %v85
    %v150 = vcvt.s32.f32 %v86
    %v151 = vcvt.s32.f32 %v87
    %v152 = vcvt.s32.f32 %v88
    %v153 = vcvt.s32.f32 %v89
    %v154 = vcvt.s32.f32 %v90
    %v155 = vcvt.s32.f32 %v91
    %vm156 = vcmask 7168
    %v157 = vsel %vm156, %v148, 0.0
    %v158 = vsel %vm156, %v149, 0.0
    %v159 = vadd.f32 %v157, %v158
    %v160 = vsel %vm156, %v150, 0.0
    %v161 = vadd.f32 %v159, %v160
    %v162 = vsel %vm156, %v151, 0.0
    %v163 = vadd.f32 %v161, %v162
    %v164 = vsel %vm156, %v152, 0.0
    %v165 = vadd.f32 %v163, %v164
    %v166 = vsel %vm156, %v153, 0.0
    %v167 = vadd.f32 %v165, %v166
    %v168 = vsel %vm156, %v154, 0.0
    %v169 = vadd.f32 %v167, %v168
    %v170 = vsel %vm156, %v155, 0.0
    %v171 = vadd.f32 %v169, %v170
    %172 = vadd.xlane.f32.xlu0 %v171
    %v173 = vpop.xlane.xlu0 %172
    %v174 = vrot.slane %v173, 4
    %v175 = vadd.f32 %v173, %v174
    %v176 = vrot.slane %v175, 2
    %v177 = vadd.f32 %v175, %v176
    %v178 = vrot.slane %v177, 1
    %v179 = vadd.f32 %v177, %v178
    %s180 = vtos %v179
    %s181 = smul.f32 %s180, -0.8087112
    %v182 = vmul.f32 %v132, %v15
    %v183 = vmul.f32 %v133, %v16
    %v184 = vmul.f32 %v134, %v17
    %v185 = vmul.f32 %v135, %v18
    %v186 = vmul.f32 %v136, %v19
    %v187 = vmul.f32 %v137, %v20
    %v188 = vmul.f32 %v138, %v21
    %v189 = vmul.f32 %v139, %v22
    %v190 = vadd.f32 %v182, %v183
    %v191 = vadd.f32 %v190, %v184
    %v192 = vadd.f32 %v191, %v185
    %v193 = vadd.f32 %v192, %v186
    %v194 = vadd.f32 %v193, %v187
    %v195 = vadd.f32 %v194, %v188
    %v196 = vadd.f32 %v195, %v189
    %197 = vadd.xlane.f32.xlu0 %v196
    %v198 = vpop.xlane.xlu0 %197
    %v199 = vrot.slane %v198, 4
    %v200 = vadd.f32 %v198, %v199
    %v201 = vrot.slane %v200, 2
    %v202 = vadd.f32 %v200, %v201
    %v203 = vrot.slane %v202, 1
    %v204 = vadd.f32 %v202, %v203
    %s205 = vtos %v204
    %s206 = ssub.f32 %s181, %s205
    %v207 = vstv %s206
    %208 = vst [vmem:[#allocation4] sm:$0x1] %v207
    // Predicated region
    $region10: #{tpu_custom_call.1} parent=1 // pred_check
      _
    $region11: #{tpu_custom_call.1} parent=1 // pred_check_branch
      %210 = sbr.rel (0) target = $region13
    $region12: #{tpu_custom_call.1} parent=1 // pred_region
      %212 = vsyncadd [#allocation3], 0
      %s213 = sshll.u32 [#allocation2], 4
      %s214 = int_to_ptr.vmem [resolvable:$true] %s213
      %s215 = sshll.u32 %s2, 4
      %s216 = int_to_ptr.hbm [resolvable:$true] %s215
      %221 = dma.vmem_to_hbm [thread:$0]  %s214, 1024, %s216, [#allocation3], 128, 128, 8
    $region13: #{tpu_custom_call.1} parent=1 // pred_fallthru
      _
    // Predicated region
    $region14: #{tpu_custom_call.1} parent=1 // pred_check
      _
    $region15: #{tpu_custom_call.1} parent=1 // pred_check_branch
      %223 = sbr.rel (0) target = $region17
    $region16: #{tpu_custom_call.1} parent=1 // pred_region
      %225 = vsyncadd [#allocation5], 0
      %s227 = sshll.u32 [#allocation4], 4
      %s228 = int_to_ptr.vmem [resolvable:$true] %s227
      %s229 = sshll.u32 %s3, 4
      %s230 = int_to_ptr.hbm [resolvable:$true] %s229
      %232 = dma.vmem_to_hbm [thread:$0]  %s228, 16, %s230, [#allocation5]
    $region17: #{tpu_custom_call.1} parent=1 // pred_fallthru
      _
    // Predicated region
    $region18: #{tpu_custom_call.1} parent=1 // pred_check
      _
    $region19: #{tpu_custom_call.1} parent=1 // pred_check_branch
      %234 = sbr.rel (0) target = $region21
    $region20: #{tpu_custom_call.1} parent=1 // pred_region
      %236 = dma.done [#allocation3], 1024
    $region21: #{tpu_custom_call.1} parent=1 // pred_fallthru
      _
    // Predicated region
    $region22: #{tpu_custom_call.1} parent=1 // pred_check
      _
    $region23: #{tpu_custom_call.1} parent=1 // pred_check_branch
      %238 = sbr.rel (0) target = $region25
    $region24: #{tpu_custom_call.1} parent=1 // pred_region
      %240 = dma.done [#allocation5], 16
    $region25: #{tpu_custom_call.1} parent=1 // pred_fallthru
      _
    %241 = vsyncpa [#allocation3], 1
    %242 = vsyncpa [#allocation5], 1

</llo_original>
